<compile_context>
chip_gen: v7x
topology: tpu7x:2x2x1
jax: 0.10.0
libtpu: 0.0.40
codegen_flags: <defaults>
</compile_context>

<pallas_src>
import functools

import jax
import jax.numpy as jnp
from jax.experimental import pallas as pl
from jax.experimental.pallas import tpu as pltpu

LN_EPS = 1e-5  # nn.LayerNorm default


def _round_up(n, m):
    return ((n + m - 1) // m) * m


def ff_kernel(x_ref, w1_ref, w2_ref, g_ref, b_ref, o_ref, *scratch,
              n_inner, ti, unroll, out_is_acc):
    # Grid: (row tiles, hidden chunks).  Hidden-chunk axis is innermost/"arbitrary";
    # when the weights are fully VMEM-resident it has a single step.
    xn_ref = scratch[0]
    acc_ref = o_ref if out_is_acc else scratch[1]
    k = pl.program_id(1)

    @pl.when(k == 0)
    def _init():
        # LayerNorm over the feature axis, once per row tile, stashed in the MXU
        # input dtype so no per-k cast / extra f32 VMEM traffic is needed.
        x = x_ref[...].astype(jnp.float32)
        mean = jnp.mean(x, axis=-1, keepdims=True)
        cent = x - mean
        var = jnp.mean(cent * cent, axis=-1, keepdims=True)
        xn = cent * jax.lax.rsqrt(var + LN_EPS)
        xn = xn * g_ref[...].astype(jnp.float32) + b_ref[...].astype(jnp.float32)
        xn_ref[...] = xn.astype(xn_ref.dtype)
        acc_ref[...] = jnp.zeros_like(acc_ref)

    xn = xn_ref[...]

    def chunk(off, acc):
        # (tm, dim) @ (dim, ti) -> (tm, ti), f32 accumulate on the MXU.
        h = jnp.dot(xn, w1_ref[:, pl.ds(off, ti)],
                    preferred_element_type=jnp.float32)
        # SiLU: x * sigmoid(x), with an approx-reciprocal sigmoid (single EUP op).
        h = h * pl.reciprocal(1.0 + jnp.exp(-h), approx=True)
        # (tm, ti) @ (ti, dim) -> accumulate into (tm, dim).
        return acc + jnp.dot(h.astype(w2_ref.dtype), w2_ref[pl.ds(off, ti), :],
                             preferred_element_type=jnp.float32)

    zero = jnp.zeros(o_ref.shape, jnp.float32)
    if n_inner == 1:
        part = chunk(0, zero)
    else:
        part = jax.lax.fori_loop(
            0, n_inner,
            lambda c, acc: chunk(pl.multiple_of(c * ti, ti), acc),
            zero, unroll=unroll)

    acc_ref[...] += part.astype(acc_ref.dtype)

    if not out_is_acc:
        @pl.when(k == pl.num_programs(1) - 1)
        def _finalize():
            # Dropout in eval mode == identity.
            o_ref[...] = acc_ref[...].astype(o_ref.dtype)


def feed_forward(x, w1, w2, gamma, beta):
    """x: (B, S, dim); w1: (dim, hidden); w2: (hidden, dim); gamma/beta: (dim,)."""
    B, S, dim = x.shape
    hidden = w1.shape[1]
    M = B * S

    out_dtype = x.dtype
    bpe_x = jnp.dtype(x.dtype).itemsize
    bpe_w = jnp.dtype(w1.dtype).itemsize
    bpe_o = jnp.dtype(out_dtype).itemsize

    # Per-generation VMEM budget: ~75% of physical, leaving headroom for compiler
    # scratch / pipeline buffers (≈48 MiB on v7x, ≈96 MiB on v5e/v6e).
    try:
        vmem_cap = int(getattr(pltpu.get_tpu_info(), "vmem_capacity_bytes",
                               64 * 1024 * 1024))
    except Exception:  # pragma: no cover - conservative fallback
        vmem_cap = 64 * 1024 * 1024
    budget = max(32 * 1024 * 1024, int(vmem_cap * 0.75))

    # Row tile: large on 128 MiB parts, capped at 256 on v7x; multiple of 8.
    tm_max = 512 if budget >= 80 * 1024 * 1024 else 256
    tm = min(tm_max, _round_up(M, 8))
    # Keep >= 2 row tiles so the "parallel" row axis can span both v7x TCs.
    if _round_up(M, tm) // tm < 2 and M > 8:
        tm = max(8, _round_up(_round_up(M, 8) // 2, 8))
    M_pad = _round_up(M, tm)
    n_rows = M_pad // tm

    # Non-weight VMEM per step: double-buffered x/out tiles, LN scratch (MXU dtype),
    # f32 accumulator, the (tm, <=256) f32 h slab (+ slack), gamma/beta.
    ti_est = min(256, hidden)
    nonweight = (2 * tm * dim * bpe_x + 2 * tm * dim * bpe_o
                 + tm * dim * bpe_w + tm * dim * 4
                 + 2 * tm * ti_est * 4 + 8 * dim * 4)

    # Hidden chunk th: keep both weights fully VMEM-resident (fetched from HBM once
    # for the whole grid) when they fit; otherwise halve until the chunks fit.
    th = hidden
    while 4 * dim * th * bpe_w + nonweight > budget and th % 2 == 0 and th > 128:
        th //= 2
    assert hidden % th == 0
    n_k = hidden // th

    # Inner sub-tile of the hidden chunk: bounds the f32 `h` intermediate.
    ti = 256 if (th > 256 and th % 256 == 0) else th
    n_inner = th // ti

    x2d = x.reshape(M, dim)
    if M_pad != M:
        x2d = jnp.pad(x2d, ((0, M_pad - M), (0, 0)))
    g2d = gamma.reshape(1, dim)
    b2d = beta.reshape(1, dim)

    out_is_acc = jnp.dtype(out_dtype) == jnp.dtype(jnp.float32)
    scratch_shapes = [pltpu.VMEM((tm, dim), w1.dtype)]              # LN output
    if not out_is_acc:
        scratch_shapes.append(pltpu.VMEM((tm, dim), jnp.float32))   # f32 accumulator

    kernel = functools.partial(ff_kernel, n_inner=n_inner, ti=ti,
                               unroll=(n_inner <= 8), out_is_acc=out_is_acc)

    # Weights hit HBM once when resident (n_k == 1), else once per row tile.
    w_streams = 1 if n_k == 1 else n_rows
    cost = pl.CostEstimate(
        flops=4 * M_pad * dim * hidden,               # two matmuls
        transcendentals=M_pad * hidden,               # exp in SiLU
        bytes_accessed=(M_pad * dim * (bpe_x + bpe_o)
                        + w_streams * 2 * dim * hidden * bpe_w
                        + 2 * dim * 4),
    )

    out2d = pl.pallas_call(
        kernel,
        out_shape=jax.ShapeDtypeStruct((M_pad, dim), out_dtype),
        grid_spec=pltpu.PrefetchScalarGridSpec(
            num_scalar_prefetch=0,
            grid=(n_rows, n_k),
            in_specs=[
                pl.BlockSpec((tm, dim), lambda i, k: (i, 0)),   # x row tile
                pl.BlockSpec((dim, th), lambda i, k: (0, k)),   # w1 chunk (resident if n_k==1)
                pl.BlockSpec((th, dim), lambda i, k: (k, 0)),   # w2 chunk
                pl.BlockSpec((1, dim), lambda i, k: (0, 0)),    # gamma
                pl.BlockSpec((1, dim), lambda i, k: (0, 0)),    # beta
            ],
            out_specs=pl.BlockSpec((tm, dim), lambda i, k: (i, 0)),
            scratch_shapes=scratch_shapes,
        ),
        compiler_params=pltpu.CompilerParams(
            dimension_semantics=("parallel", "arbitrary"),
            vmem_limit_bytes=int(budget),
        ),
        cost_estimate=cost,
    )(x2d, w1, w2, g2d, b2d)

    return out2d[:M].reshape(B, S, dim)


def reference(x, w1, w2, gamma, beta):
    xf = x.astype(jnp.float32)
    mean = jnp.mean(xf, axis=-1, keepdims=True)
    var = jnp.mean((xf - mean) ** 2, axis=-1, keepdims=True)
    xn = (xf - mean) * jax.lax.rsqrt(var + LN_EPS) * gamma + beta
    h = xn @ w1.astype(jnp.float32)
    h = h * jax.nn.sigmoid(h)
    return (h @ w2.astype(jnp.float32)).astype(x.dtype)


if __name__ == "__main__":
    # Small shapes consistent with the module (hidden = 2*dim default);
    # dim=128 keeps the feature axis lane-dense.
    B, S, dim = 2, 8, 128
    hidden = 2 * dim

    key = jax.random.PRNGKey(0)
    kx, k1, k2 = jax.random.split(key, 3)

    x = jax.random.normal(kx, (B, S, dim), dtype=jnp.float32)
    # Linear weights pre-transposed to (in, out); Linear bias=False; LN default init.
    w1 = jax.random.normal(k1, (dim, hidden), dtype=jnp.float32) * 0.05
    w2 = jax.random.normal(k2, (hidden, dim), dtype=jnp.float32) * 0.05
    gamma = jnp.ones((dim,), dtype=jnp.float32)
    beta = jnp.zeros((dim,), dtype=jnp.float32)

    out = feed_forward(x, w1, w2, gamma, beta)
    jax.block_until_ready(out)

    ref = reference(x, w1, w2, gamma, beta)
    assert out.shape == (B, S, dim)
    max_err = float(jnp.max(jnp.abs(out - ref)))
    assert jnp.allclose(out, ref, atol=2e-3, rtol=2e-3), max_err
    print("KERNEL_OK")
</pallas_src>

<mosaic_0001>
module attributes {stable_mosaic.version = 11 : i64} {
  func.func @ff_kernel(%arg0: i32, %arg1: i32, %arg2: memref<8x128xf32, #tpu.memory_space<vmem>>, %arg3: memref<128x256xf32, #tpu.memory_space<vmem>>, %arg4: memref<256x128xf32, #tpu.memory_space<vmem>>, %arg5: memref<1x128xf32, #tpu.memory_space<vmem>>, %arg6: memref<1x128xf32, #tpu.memory_space<vmem>>, %arg7: memref<8x128xf32, #tpu.memory_space<vmem>>, %arg8: memref<8x128xf32, #tpu.memory_space<vmem>>) attributes {dimension_semantics = [#tpu.dimension_semantics<parallel>, #tpu.dimension_semantics<arbitrary>], iteration_bounds = array<i64: 2, 1>, scalar_prefetch = 0 : i64, scratch_operands = 1 : i64, tpu.core_type = #tpu.core_type<tc>, window_params = [{transform_indices = @transform_0, window_bounds = array<i64: 8, 128>}, {transform_indices = @transform_1, window_bounds = array<i64: 128, 256>}, {transform_indices = @transform_2, window_bounds = array<i64: 256, 128>}, {pipeline_mode = #tpu.pipeline_mode<synchronous>, transform_indices = @transform_3, window_bounds = array<i64: 1, 128>}, {pipeline_mode = #tpu.pipeline_mode<synchronous>, transform_indices = @transform_4, window_bounds = array<i64: 1, 128>}, {transform_indices = @transform_5, window_bounds = array<i64: 8, 128>}]} {
    %c0_i32 = arith.constant 0 : i32
    %0 = arith.cmpi eq, %arg1, %c0_i32 : i32
    %1 = arith.extui %0 : i1 to i32
    %c0_i32_0 = arith.constant 0 : i32
    %2 = arith.cmpi ne, %1, %c0_i32_0 : i32
    scf.if %2 {
      %c0_14 = arith.constant 0 : index
      %c0_15 = arith.constant 0 : index
      %20 = vector.load %arg2[%c0_14, %c0_15] : memref<8x128xf32, #tpu.memory_space<vmem>>, vector<8x128xf32>
      %cst_16 = arith.constant dense<0.000000e+00> : vector<8xf32>
      %21 = vector.multi_reduction <add>, %20, %cst_16 [1] : vector<8x128xf32> to vector<8xf32>
      %22 = vector.shape_cast %21 : vector<8xf32> to vector<8x1xf32>
      %cst_17 = arith.constant 1.280000e+02 : f32
      %23 = vector.broadcast %cst_17 : f32 to vector<8x1xf32>
      %24 = arith.divf %22, %23 : vector<8x1xf32>
      %25 = vector.broadcast %24 : vector<8x1xf32> to vector<8x128xf32>
      %26 = arith.subf %20, %25 : vector<8x128xf32>
      %27 = arith.mulf %26, %26 : vector<8x128xf32>
      %cst_18 = arith.constant dense<0.000000e+00> : vector<8xf32>
      %28 = vector.multi_reduction <add>, %27, %cst_18 [1] : vector<8x128xf32> to vector<8xf32>
      %29 = vector.shape_cast %28 : vector<8xf32> to vector<8x1xf32>
      %cst_19 = arith.constant 1.280000e+02 : f32
      %30 = vector.broadcast %cst_19 : f32 to vector<8x1xf32>
      %31 = arith.divf %29, %30 : vector<8x1xf32>
      %cst_20 = arith.constant 9.99999974E-6 : f32
      %32 = vector.broadcast %cst_20 : f32 to vector<8x1xf32>
      %33 = arith.addf %31, %32 : vector<8x1xf32>
      %34 = math.rsqrt %33 : vector<8x1xf32>
      %35 = vector.broadcast %34 : vector<8x1xf32> to vector<8x128xf32>
      %36 = arith.mulf %26, %35 : vector<8x128xf32>
      %c0_21 = arith.constant 0 : index
      %c0_22 = arith.constant 0 : index
      %37 = vector.load %arg5[%c0_21, %c0_22] : memref<1x128xf32, #tpu.memory_space<vmem>>, vector<1x128xf32>
      %38 = vector.broadcast %37 : vector<1x128xf32> to vector<8x128xf32>
      %39 = arith.mulf %36, %38 : vector<8x128xf32>
      %c0_23 = arith.constant 0 : index
      %c0_24 = arith.constant 0 : index
      %40 = vector.load %arg6[%c0_23, %c0_24] : memref<1x128xf32, #tpu.memory_space<vmem>>, vector<1x128xf32>
      %41 = vector.broadcast %40 : vector<1x128xf32> to vector<8x128xf32>
      %42 = arith.addf %39, %41 : vector<8x128xf32>
      %c0_25 = arith.constant 0 : index
      %c0_26 = arith.constant 0 : index
      %43 = vector.load %arg8[%c0_25, %c0_26] : memref<8x128xf32, #tpu.memory_space<vmem>>, vector<8x128xf32>
      tpu.vector_store %arg8[%c0_25, %c0_26], %42 {strides = array<i32>} : memref<8x128xf32, #tpu.memory_space<vmem>>, vector<8x128xf32>,
      %cst_27 = arith.constant 0.000000e+00 : f32
      %44 = vector.broadcast %cst_27 : f32 to vector<8x128xf32>
      %c0_28 = arith.constant 0 : index
      %c0_29 = arith.constant 0 : index
      %45 = vector.load %arg7[%c0_28, %c0_29] : memref<8x128xf32, #tpu.memory_space<vmem>>, vector<8x128xf32>
      tpu.vector_store %arg7[%c0_28, %c0_29], %44 {strides = array<i32>} : memref<8x128xf32, #tpu.memory_space<vmem>>, vector<8x128xf32>,
    } else {
    }
    %c0 = arith.constant 0 : index
    %c0_1 = arith.constant 0 : index
    %3 = vector.load %arg8[%c0, %c0_1] : memref<8x128xf32, #tpu.memory_space<vmem>>, vector<8x128xf32>
    %cst = arith.constant 0.000000e+00 : f32
    %4 = vector.broadcast %cst : f32 to vector<8x128xf32>
    %c0_2 = arith.constant 0 : index
    %c0_3 = arith.constant 0 : index
    %5 = vector.load %arg3[%c0_2, %c0_3] : memref<128x256xf32, #tpu.memory_space<vmem>>, vector<128x256xf32>
    %cst_4 = arith.constant dense<0.000000e+00> : vector<8x256xf32>
    %6 = tpu.matmul %3, %5, %cst_4 {dimension_numbers = #tpu.dot_dimension_numbers<[1], [0], [0], [1], [0, 0, 1, 1], [], []>} : vector<8x128xf32>, vector<128x256xf32>, vector<8x256xf32> -> vector<8x256xf32>
    %cst_5 = arith.constant 0.000000e+00 : f32
    %7 = vector.broadcast %cst_5 : f32 to vector<8x256xf32>
    %8 = arith.subf %7, %6 : vector<8x256xf32>
    %9 = math.exp %8 : vector<8x256xf32>
    %cst_6 = arith.constant 1.000000e+00 : f32
    %10 = vector.broadcast %cst_6 : f32 to vector<8x256xf32>
    %11 = arith.addf %10, %9 : vector<8x256xf32>
    %12 = tpu.reciprocal %11 {approx = true} : vector<8x256xf32> -> vector<8x256xf32>
    %13 = arith.mulf %6, %12 : vector<8x256xf32>
    %c0_7 = arith.constant 0 : index
    %c0_8 = arith.constant 0 : index
    %14 = vector.load %arg4[%c0_7, %c0_8] : memref<256x128xf32, #tpu.memory_space<vmem>>, vector<256x128xf32>
    %cst_9 = arith.constant dense<0.000000e+00> : vector<8x128xf32>
    %15 = tpu.matmul %13, %14, %cst_9 {dimension_numbers = #tpu.dot_dimension_numbers<[1], [0], [0], [1], [0, 0, 1, 1], [], []>} : vector<8x256xf32>, vector<256x128xf32>, vector<8x128xf32> -> vector<8x128xf32>
    %16 = arith.addf %4, %15 : vector<8x128xf32>
    %c0_10 = arith.constant 0 : index
    %c0_11 = arith.constant 0 : index
    %17 = vector.load %arg7[%c0_10, %c0_11] : memref<8x128xf32, #tpu.memory_space<vmem>>, vector<8x128xf32>
    %18 = arith.addf %17, %16 : vector<8x128xf32>
    %c0_12 = arith.constant 0 : index
    %c0_13 = arith.constant 0 : index
    %19 = vector.load %arg7[%c0_12, %c0_13] : memref<8x128xf32, #tpu.memory_space<vmem>>, vector<8x128xf32>
    tpu.vector_store %arg7[%c0_12, %c0_13], %18 {strides = array<i32>} : memref<8x128xf32, #tpu.memory_space<vmem>>, vector<8x128xf32>,
    return
  }
  func.func @transform_0(%arg0: i32, %arg1: i32) -> (i32, i32) {
    %c0_i32 = arith.constant 0 : i32
    %c0_i32_0 = arith.constant 0 : i32
    return %arg0, %c0_i32 : i32, i32
  }
  func.func @transform_1(%arg0: i32, %arg1: i32) -> (i32, i32) {
    %c0_i32 = arith.constant 0 : i32
    %c0_i32_0 = arith.constant 0 : i32
    return %c0_i32, %arg1 : i32, i32
  }
  func.func @transform_2(%arg0: i32, %arg1: i32) -> (i32, i32) {
    %c0_i32 = arith.constant 0 : i32
    %c0_i32_0 = arith.constant 0 : i32
    return %arg1, %c0_i32 : i32, i32
  }
  func.func @transform_3(%arg0: i32, %arg1: i32) -> (i32, i32) {
    %c0_i32 = arith.constant 0 : i32
    %c0_i32_0 = arith.constant 0 : i32
    %c0_i32_1 = arith.constant 0 : i32
    return %c0_i32, %c0_i32_0 : i32, i32
  }
  func.func @transform_4(%arg0: i32, %arg1: i32) -> (i32, i32) {
    %c0_i32 = arith.constant 0 : i32
    %c0_i32_0 = arith.constant 0 : i32
    %c0_i32_1 = arith.constant 0 : i32
    return %c0_i32, %c0_i32_0 : i32, i32
  }
  func.func @transform_5(%arg0: i32, %arg1: i32) -> (i32, i32) {
    %c0_i32 = arith.constant 0 : i32
    %c0_i32_0 = arith.constant 0 : i32
    return %arg0, %c0_i32 : i32, i32
  }
}

</mosaic_0001>

<llo_original>
// kernel: tpu_custom_call.1
$region0: #{tpu_custom_call.1}
  #allocation0 [shape = 'u32[]', space=smem, size = 0x4, offset = 0x4, fixed_abs, tag = 'smem constant byte address 0x4 - core index']
  #allocation1 [shape = 'u32[144,128]{1,0:T(1,128)}', space=vmem, size = 0x12000, scoped, tag = 'internal scratch']
  #allocation2 [shape = 'f32[8,128]{1,0:T(8,128)}', space=vmem, size = 0x1000, scoped, tag = 'scratch operand']
  %s0 = inlined_call_operand.hbm [shape: f32[16,128], index: 0, kind: input, shape index: {}]
  %s1 = inlined_call_operand.hbm [shape: f32[128,256], index: 1, kind: input, shape index: {}]
  %s2 = inlined_call_operand.hbm [shape: f32[256,128], index: 2, kind: input, shape index: {}]
  %s3 = inlined_call_operand.vmem [shape: f32[1,128], index: 3, kind: input, shape index: {}]
  %s4 = inlined_call_operand.vmem [shape: f32[1,128], index: 4, kind: input, shape index: {}]
  %s5 = inlined_call_operand.hbm [shape: f32[16,128], index: 5, kind: output, shape index: {}]
  %s6 = sld [smem:[#allocation0]]
  $region69: #{tpu_custom_call.1} parent=0
    _
  %s8 = ssub.s32 1, %s6
  %s9 = scalar_select 0, %s8, %s6
  $region1: #{tpu_custom_call.1} parent=0
    #allocation3 [shape = 'u8[8192]{0}', space=vmem, size = 0x2000, scoped, tag = 'input window, operand 0']
    #allocation4 [shape = 's32[2]{0}', space=sflag, size = 0x8, scoped, tag = 'scoped memory for tpu_custom_call.1']
    #allocation5 [shape = 's32[2]{0}', space=sflag, size = 0x8, scoped, tag = 'scoped memory for tpu_custom_call.1']
    #allocation6 [shape = 'u8[131072]{0}', space=vmem, size = 0x20000, scoped, tag = 'input window, operand 1, single buffered']
    #allocation7 [shape = 's32[1]{0}', space=sflag, size = 0x4, scoped, tag = 'scoped memory for tpu_custom_call.1']
    #allocation8 [shape = 'u8[131072]{0}', space=vmem, size = 0x20000, scoped, tag = 'input window, operand 2, single buffered']
    #allocation9 [shape = 'u8[8192]{0}', space=vmem, size = 0x2000, scoped, tag = 'output window, operand 0']
    %10 = vsyncpa [#allocation4], 0
    %s11 = scalar_lea.sflag [#allocation4], 1
    %12 = vsyncpa %s11, 0
    %13 = vsyncpa [#allocation7], 0
    %14 = vsyncpa [#allocation5], 0
    %s15 = scalar_lea.sflag [#allocation5], 1
    %16 = vsyncpa %s15, 0
    loop: start=0, step=1, limit=4
    $region2: #{tpu_custom_call.1} parent=1 // loop_pre_header
      _
    $region3: #{tpu_custom_call.1} parent=1 // loop_header
      %s18 = sphi 0, %s22
      %p19 = scmp.ge.s32.totalorder %s18, 4
      %s25 = sphi 0, %s37
      %s26 = sphi 0, %s33
      %s27 = sphi 0, %s25
      %s28 = sphi 0, %s26
      %s29 = sphi 0, %s27
      %s30 = sphi 0, %s28
      %s40 = sphi 0, %s42
      %s43 = sphi 0, %s40
      %s44 = sphi 0, %s43
      %s60 = sphi 0, %s44
      %s66 = sphi 0, %s68
      %s69 = sphi 0, %s66
      %s70 = sphi 0, %s69
      %s86 = sphi 0, %s70
      %s92 = sphi 0, %s94
      %s95 = sphi 0, %s92
      %s96 = sphi 0, %s95
      %s112 = sphi 0, %s96
      %s116 = sphi 0, %s116
      %s118 = sphi 0, %s116
      %s119 = sphi 0, %s118
      %s133 = sphi 0, %s119
      %s137 = sphi 0, %s137
      %s139 = sphi 0, %s137
      %s140 = sphi 0, %s139
      %s154 = sphi 0, %s140
      %s160 = sphi 0, %s162
      %s163 = sphi 0, %s160
      %s164 = sphi 0, %s163
      %s180 = sphi 0, %s164
    $region4: #{tpu_custom_call.1} parent=1 // loop_header_branch
      %21 = sbr.rel (%p19) target = $region8
    $region5: #{tpu_custom_call.1} parent=1 // loop_body
      %s23 = ssub.s32 %s18, 1
      %s24 = ssub.s32 %s18, 2
      %s31 = sadd.s32 1, %s26
      %p32 = scmp.ge.s32.totalorder %s31, 1
      %s33 = scalar_select %p32, 0, %s31
      %s34 = sadd.s32 1, %s25
      %s35 = scalar_select %p32, %s34, %s25
      %p36 = scmp.ge.s32.totalorder %s35, 2
      %s37 = scalar_select %p36, 0, %s35
      %s38 = ssub.s32 %s25, %s37
      %p39 = scmp.eq.s32.totalorder %s38, 0
      %s41 = sadd.s32 %s40, 1
      %s42 = scalar_select %p39, %s40, %s41
      %p45 = pneg %p39
      %p46 = scmp.eq.s32.totalorder %s18, 1
      %p47 = por %p45, %p46
      %p48 = scmp.ne.s32.totalorder %s40, %s43
      %p49 = scmp.eq.s32.totalorder %s18, 0
      %p50 = por %p48, %p49
      %p51 = scmp.ne.s32.totalorder %s40, %s43
      %p52 = scmp.eq.s32.totalorder %s23, 1
      %p53 = por %p51, %p52
      %p54 = scmp.ne.s32.totalorder %s43, %s44
      %p55 = scmp.eq.s32.totalorder %s23, 0
      %p56 = por %p54, %p55
      %p57 = scmp.ne.s32.totalorder %s43, %s44
      %p58 = scmp.eq.s32.totalorder %s24, 1
      %p59 = por %p57, %p58
      %p61 = scmp.ne.s32.totalorder %s44, %s60
      %p62 = scmp.eq.s32.totalorder %s24, 0
      %p63 = por %p61, %p62
      %s64 = ssub.s32 %s26, %s33
      %p65 = scmp.eq.s32.totalorder %s64, 0
      %s67 = sadd.s32 %s66, 1
      %s68 = scalar_select %p65, %s66, %s67
      %p71 = pneg %p65
      %p72 = scmp.eq.s32.totalorder %s18, 1
      %p73 = por %p71, %p72
      %p74 = scmp.ne.s32.totalorder %s66, %s69
      %p75 = scmp.eq.s32.totalorder %s18, 0
      %p76 = por %p74, %p75
      %p77 = scmp.ne.s32.totalorder %s66, %s69
      %p78 = scmp.eq.s32.totalorder %s23, 1
      %p79 = por %p77, %p78
      %p80 = scmp.ne.s32.totalorder %s69, %s70
      %p81 = scmp.eq.s32.totalorder %s23, 0
      %p82 = por %p80, %p81
      %p83 = scmp.ne.s32.totalorder %s69, %s70
      %p84 = scmp.eq.s32.totalorder %s24, 1
      %p85 = por %p83, %p84
      %p87 = scmp.ne.s32.totalorder %s70, %s86
      %p88 = scmp.eq.s32.totalorder %s24, 0
      %p89 = por %p87, %p88
      %s90 = ssub.s32 %s26, %s33
      %p91 = scmp.eq.s32.totalorder %s90, 0
      %s93 = sadd.s32 %s92, 1
      %s94 = scalar_select %p91, %s92, %s93
      %p97 = pneg %p91
      %p98 = scmp.eq.s32.totalorder %s18, 1
      %p99 = por %p97, %p98
      %p100 = scmp.ne.s32.totalorder %s92, %s95
      %p101 = scmp.eq.s32.totalorder %s18, 0
      %p102 = por %p100, %p101
      %p103 = scmp.ne.s32.totalorder %s92, %s95
      %p104 = scmp.eq.s32.totalorder %s23, 1
      %p105 = por %p103, %p104
      %p106 = scmp.ne.s32.totalorder %s95, %s96
      %p107 = scmp.eq.s32.totalorder %s23, 0
      %p108 = por %p106, %p107
      %p109 = scmp.ne.s32.totalorder %s95, %s96
      %p110 = scmp.eq.s32.totalorder %s24, 1
      %p111 = por %p109, %p110
      %p113 = scmp.ne.s32.totalorder %s96, %s112
      %p114 = scmp.eq.s32.totalorder %s24, 0
      %p115 = por %p113, %p114
      %s117 = sadd.s32 %s116, 1
      %p120 = scmp.eq.s32.totalorder %s18, 1
      %p121 = scmp.ne.s32.totalorder %s116, %s118
      %p122 = scmp.eq.s32.totalorder %s18, 0
      %p123 = por %p121, %p122
      %p124 = scmp.ne.s32.totalorder %s116, %s118
      %p125 = scmp.eq.s32.totalorder %s23, 1
      %p126 = por %p124, %p125
      %p127 = scmp.ne.s32.totalorder %s118, %s119
      %p128 = scmp.eq.s32.totalorder %s23, 0
      %p129 = por %p127, %p128
      %p130 = scmp.ne.s32.totalorder %s118, %s119
      %p131 = scmp.eq.s32.totalorder %s24, 1
      %p132 = por %p130, %p131
      %p134 = scmp.ne.s32.totalorder %s119, %s133
      %p135 = scmp.eq.s32.totalorder %s24, 0
      %p136 = por %p134, %p135
      %s138 = sadd.s32 %s137, 1
      %p141 = scmp.eq.s32.totalorder %s18, 1
      %p142 = scmp.ne.s32.totalorder %s137, %s139
      %p143 = scmp.eq.s32.totalorder %s18, 0
      %p144 = por %p142, %p143
      %p145 = scmp.ne.s32.totalorder %s137, %s139
      %p146 = scmp.eq.s32.totalorder %s23, 1
      %p147 = por %p145, %p146
      %p148 = scmp.ne.s32.totalorder %s139, %s140
      %p149 = scmp.eq.s32.totalorder %s23, 0
      %p150 = por %p148, %p149
      %p151 = scmp.ne.s32.totalorder %s139, %s140
      %p152 = scmp.eq.s32.totalorder %s24, 1
      %p153 = por %p151, %p152
      %p155 = scmp.ne.s32.totalorder %s140, %s154
      %p156 = scmp.eq.s32.totalorder %s24, 0
      %p157 = por %p155, %p156
      %s158 = ssub.s32 %s25, %s37
      %p159 = scmp.eq.s32.totalorder %s158, 0
      %s161 = sadd.s32 %s160, 1
      %s162 = scalar_select %p159, %s160, %s161
      %p165 = pneg %p159
      %p166 = scmp.eq.s32.totalorder %s18, 1
      %p167 = por %p165, %p166
      %p168 = scmp.ne.s32.totalorder %s160, %s163
      %p169 = scmp.eq.s32.totalorder %s18, 0
      %p170 = por %p168, %p169
      %p171 = scmp.ne.s32.totalorder %s160, %s163
      %p172 = scmp.eq.s32.totalorder %s23, 1
      %p173 = por %p171, %p172
      %p174 = scmp.ne.s32.totalorder %s163, %s164
      %p175 = scmp.eq.s32.totalorder %s23, 0
      %p176 = por %p174, %p175
      %p177 = scmp.ne.s32.totalorder %s163, %s164
      %p178 = scmp.eq.s32.totalorder %s24, 1
      %p179 = por %p177, %p178
      %p181 = scmp.ne.s32.totalorder %s164, %s180
      %p182 = scmp.eq.s32.totalorder %s24, 0
      %p183 = por %p181, %p182
      %p184 = scmp.le.s32.totalorder 1, %s18
      %p185 = scmp.lt.s32.totalorder %s18, 3
      %p186 = pnand %p184, %p185
      %p187 = pneg %p186
      // Predicated region
      $region9: #{tpu_custom_call.1} parent=5 // pred_check
        _
      $region10: #{tpu_custom_call.1} parent=5 // pred_check_branch
        %189 = sbr.rel (%p186) target = $region12
      $region11: #{tpu_custom_call.1} parent=5 // pred_region
        %s190 = ssub.s32 %s18, 1
        // Predicated region
        $region13: #{tpu_custom_call.1} parent=11 // pred_check
          %p191 = pneg %p82
        $region14: #{tpu_custom_call.1} parent=11 // pred_check_branch
          %193 = sbr.rel (%p191) target = $region16
        $region15: #{tpu_custom_call.1} parent=11 // pred_region
          %s194 = smul.u32 2, %s28
          %s196 = ssub.s32 4096, 4096
          %197 = vsyncadd [#allocation7], %s196
          %s198 = smul.addr %s194, 128
          %s199 = scalar_lea.hbm %s1, %s198
          %s200 = sshll.u32 [#allocation6], 4
          %s201 = int_to_ptr.vmem [resolvable:$true] %s200
          %206 = dma.hbm_to_vmem [thread:$0]  %s199, 4096, %s201, [#allocation7], 256, 256, 16
        $region16: #{tpu_custom_call.1} parent=11 // pred_fallthru
          _
        // Predicated region
        $region17: #{tpu_custom_call.1} parent=11 // pred_check
          %p207 = pneg %p108
        $region18: #{tpu_custom_call.1} parent=11 // pred_check_branch
          %209 = sbr.rel (%p207) target = $region20
        $region19: #{tpu_custom_call.1} parent=11 // pred_region
          %s210 = smul.u32 32, %s28
          %s212 = ssub.s32 4096, 4096
          %213 = vsyncadd [#allocation7], %s212
          %s214 = smul.addr %s210, 128
          %s215 = scalar_lea.hbm %s2, %s214
          %s216 = sshll.u32 [#allocation8], 4
          %s217 = int_to_ptr.vmem [resolvable:$true] %s216
          %222 = dma.hbm_to_vmem [thread:$0]  %s215, 4096, %s217, [#allocation7], 128, 128, 8
        $region20: #{tpu_custom_call.1} parent=11 // pred_fallthru
          _
        // Predicated region
        $region21: #{tpu_custom_call.1} parent=11 // pred_check
          %p223 = pneg %p129
        $region22: #{tpu_custom_call.1} parent=11 // pred_check_branch
          %225 = sbr.rel (%p223) target = $region24
        $region23: #{tpu_custom_call.1} parent=11 // pred_region
          _
        $region24: #{tpu_custom_call.1} parent=11 // pred_fallthru
          _
        // Predicated region
        $region25: #{tpu_custom_call.1} parent=11 // pred_check
          %p226 = pneg %p150
        $region26: #{tpu_custom_call.1} parent=11 // pred_check_branch
          %228 = sbr.rel (%p226) target = $region28
        $region27: #{tpu_custom_call.1} parent=11 // pred_region
          _
        $region28: #{tpu_custom_call.1} parent=11 // pred_fallthru
          _
      $region12: #{tpu_custom_call.1} parent=5 // pred_fallthru
        _
      %p229 = scmp.lt.s32.totalorder %s18, 2
      // Predicated region
      $region29: #{tpu_custom_call.1} parent=5 // pred_check
        %p230 = pneg %p229
      $region30: #{tpu_custom_call.1} parent=5 // pred_check_branch
        %232 = sbr.rel (%p230) target = $region32
      $region31: #{tpu_custom_call.1} parent=5 // pred_region
        // Predicated region
        $region33: #{tpu_custom_call.1} parent=31 // pred_check
          %p233 = pneg %p50
        $region34: #{tpu_custom_call.1} parent=31 // pred_check_branch
          %235 = sbr.rel (%p233) target = $region36
        $region35: #{tpu_custom_call.1} parent=31 // pred_region
          %s236 = sand.u32 %s40, 1
          %s237 = scalar_lea.sflag [#allocation4], %s236
          %s238 = sand.u32 %s40, 1
          %s239 = smul.addr %s238, 8
          %s240 = scalar_lea.vmem [#allocation3], %s239
          %s242 = ssub.s32 128, 128
          %243 = vsyncadd %s237, %s242
          %s244 = smul.addr %s25, 128
          %s245 = scalar_lea.hbm %s0, %s244
          %s247 = sshll.u32 %s240, 4
          %s248 = int_to_ptr.vmem [resolvable:$true] %s247
          %250 = dma.hbm_to_vmem [thread:$0]  %s245, 128, %s248, %s237
        $region36: #{tpu_custom_call.1} parent=31 // pred_fallthru
          _
      $region32: #{tpu_custom_call.1} parent=5 // pred_fallthru
        _
      %p251 = scmp.le.s32.totalorder 1, %s18
      %p252 = scmp.lt.s32.totalorder %s18, 3
      %p253 = pnand %p251, %p252
      %p254 = pneg %p253
      // Predicated region
      $region37: #{tpu_custom_call.1} parent=5 // pred_check
        _
      $region38: #{tpu_custom_call.1} parent=5 // pred_check_branch
        %256 = sbr.rel (%p253) target = $region40
      $region39: #{tpu_custom_call.1} parent=5 // pred_region
        %s257 = ssub.s32 %s18, 1
        %s258 = sand.u32 %s43, 1
        %s259 = scalar_lea.sflag [#allocation4], %s258
        %s260 = sand.u32 %s43, 1
        %s261 = smul.addr %s260, 8
        %s262 = scalar_lea.vmem [#allocation3], %s261
        // Predicated region
        $region41: #{tpu_custom_call.1} parent=39 // pred_check
          %p263 = pneg %p56
        $region42: #{tpu_custom_call.1} parent=39 // pred_check_branch
          %265 = sbr.rel (%p263) target = $region44
        $region43: #{tpu_custom_call.1} parent=39 // pred_region
          %266 = dma.done %s259, 128
        $region44: #{tpu_custom_call.1} parent=39 // pred_fallthru
          _
        // Predicated region
        $region45: #{tpu_custom_call.1} parent=39 // pred_check
          %p267 = pneg %p82
        $region46: #{tpu_custom_call.1} parent=39 // pred_check_branch
          %269 = sbr.rel (%p267) target = $region48
        $region47: #{tpu_custom_call.1} parent=39 // pred_region
          %270 = dma.done [#allocation7], 4096
        $region48: #{tpu_custom_call.1} parent=39 // pred_fallthru
          _
        // Predicated region
        $region49: #{tpu_custom_call.1} parent=39 // pred_check
          %p271 = pneg %p108
        $region50: #{tpu_custom_call.1} parent=39 // pred_check_branch
          %273 = sbr.rel (%p271) target = $region52
        $region51: #{tpu_custom_call.1} parent=39 // pred_region
          %274 = dma.done [#allocation7], 4096
        $region52: #{tpu_custom_call.1} parent=39 // pred_fallthru
          _
        %s275 = sand.u32 %s43, 1
        %s276 = scalar_lea.sflag [#allocation4], %s275
        %s277 = sand.u32 %s43, 1
        %s278 = smul.addr %s277, 8
        %s279 = scalar_lea.vmem [#allocation3], %s278
        %p280 = pneg %p56
        %p281 = pneg %p53
        %p282 = pneg %p82
        %p283 = pneg %p79
        %p284 = pneg %p108
        %p285 = pneg %p105
        %p286 = pneg %p129
        %p287 = pneg %p126
        %p288 = pneg %p150
        %p289 = pneg %p147
        %p290 = pneg %p176
        %p291 = pneg %p173
        %s292 = sand.u32 %s163, 1
        %s293 = scalar_lea.sflag [#allocation5], %s292
        %s294 = sand.u32 %s163, 1
        %s295 = smul.addr %s294, 8
        %s296 = scalar_lea.vmem [#allocation9], %s295
        %s297 = smul.u32 2, %s28
        %s298 = smul.u32 32, %s28
        %p299 = scmp.eq.s32.totalorder %s28, 0
        // Predicated region
        $region53: #{tpu_custom_call.1} parent=39 // pred_check
          %p300 = pneg %p299
        $region54: #{tpu_custom_call.1} parent=39 // pred_check_branch
          %302 = sbr.rel (%p300) target = $region56
        $region55: #{tpu_custom_call.1} parent=39 // pred_region
          %v303 = vld [vmem:[%s262] sm:$0xff]
          %304 = vadd.xlane.f32.xlu0 %v303
          %v305 = vpop.xlane.xlu0 %304
          %v306 = vrcp.pop 128.0
          %v307 = vmul.f32 %v305, %v306
          %v308 = vsub.f32 %v303, %v307
          %v309 = vmul.f32 %v308, %v308
          %310 = vadd.xlane.f32.xlu0 %v309
          %v311 = vpop.xlane.xlu0 %310
          %v312 = vmul.f32 %v311, %v306
          %v313 = vadd.f32 %v312, 1e-05
          %v314 = vrsqrt.pop %v313
          %v315 = vmul.f32 %v308, %v314
          %v316 = vld [vmem:[%s3] sm:$0x1]
          %v318 = vlaneseq
          %v319 = vshrl.u32 %v318, 7
          %v320 = vsub.s32 0, %v319
          %v321 = vrot.slane %v316, %v320
          %v323 = vmul.f32 %v315, %v321
          %v324 = vld [vmem:[%s4] sm:$0x1]
          %v326 = vlaneseq
          %v327 = vshrl.u32 %v326, 7
          %v328 = vsub.s32 0, %v327
          %v329 = vrot.slane %v324, %v328
          %v331 = vadd.f32 %v323, %v329
          %332 = vst [vmem:[#allocation2] sm:$0xff] %v331
          %333 = vst [vmem:[%s296] sm:$0xff] 0.0
        $region56: #{tpu_custom_call.1} parent=39 // pred_fallthru
          _
        %v334 = vld [vmem:[#allocation2] sm:$0xff]
        %v335 = vld [vmem:[#allocation6] sm:$0xff]
        %v336 = vld [vmem:[#allocation6 + $0x8] sm:$0xff]
        %v337 = vld [vmem:[#allocation6 + $0x10] sm:$0xff]
        %v338 = vld [vmem:[#allocation6 + $0x18] sm:$0xff]
        %v339 = vld [vmem:[#allocation6 + $0x20] sm:$0xff]
        %v340 = vld [vmem:[#allocation6 + $0x28] sm:$0xff]
        %v341 = vld [vmem:[#allocation6 + $0x30] sm:$0xff]
        %v342 = vld [vmem:[#allocation6 + $0x38] sm:$0xff]
        %v343 = vld [vmem:[#allocation6 + $0x40] sm:$0xff]
        %v344 = vld [vmem:[#allocation6 + $0x48] sm:$0xff]
        %v345 = vld [vmem:[#allocation6 + $0x50] sm:$0xff]
        %v346 = vld [vmem:[#allocation6 + $0x58] sm:$0xff]
        %v347 = vld [vmem:[#allocation6 + $0x60] sm:$0xff]
        %v348 = vld [vmem:[#allocation6 + $0x68] sm:$0xff]
        %v349 = vld [vmem:[#allocation6 + $0x70] sm:$0xff]
        %v350 = vld [vmem:[#allocation6 + $0x78] sm:$0xff]
        %v351 = vld [vmem:[#allocation6 + $0x80] sm:$0xff]
        %v352 = vld [vmem:[#allocation6 + $0x88] sm:$0xff]
        %v353 = vld [vmem:[#allocation6 + $0x90] sm:$0xff]
        %v354 = vld [vmem:[#allocation6 + $0x98] sm:$0xff]
        %v355 = vld [vmem:[#allocation6 + $0xa0] sm:$0xff]
        %v356 = vld [vmem:[#allocation6 + $0xa8] sm:$0xff]
        %v357 = vld [vmem:[#allocation6 + $0xb0] sm:$0xff]
        %v358 = vld [vmem:[#allocation6 + $0xb8] sm:$0xff]
        %v359 = vld [vmem:[#allocation6 + $0xc0] sm:$0xff]
        %v360 = vld [vmem:[#allocation6 + $0xc8] sm:$0xff]
        %v361 = vld [vmem:[#allocation6 + $0xd0] sm:$0xff]
        %v362 = vld [vmem:[#allocation6 + $0xd8] sm:$0xff]
        %v363 = vld [vmem:[#allocation6 + $0xe0] sm:$0xff]
        %v364 = vld [vmem:[#allocation6 + $0xe8] sm:$0xff]
        %v365 = vld [vmem:[#allocation6 + $0xf0] sm:$0xff]
        %v366 = vld [vmem:[#allocation6 + $0xf8] sm:$0xff]
        %367 = vmatprep.subr.mxu0 %v336
        %368 = vmatpush1.msra.mxu0 %v335
        %369 = vmatprep.subr.mxu0 %v338
        %370 = vmatpush1.msra.mxu0 %v337
        %371 = vmatprep.subr.mxu0 %v340
        %372 = vmatpush1.msra.mxu0 %v339
        %373 = vmatprep.subr.mxu0 %v342
        %374 = vmatpush1.msra.mxu0 %v341
        %375 = vmatprep.subr.mxu0 %v344
        %376 = vmatpush1.msra.mxu0 %v343
        %377 = vmatprep.subr.mxu0 %v346
        %378 = vmatpush1.msra.mxu0 %v345
        %379 = vmatprep.subr.mxu0 %v348
        %380 = vmatpush1.msra.mxu0 %v347
        %381 = vmatprep.subr.mxu0 %v350
        %382 = vmatpush1.msra.mxu0 %v349
        %383 = vmatprep.subr.mxu0 %v352
        %384 = vmatpush1.msra.mxu0 %v351
        %385 = vmatprep.subr.mxu0 %v354
        %386 = vmatpush1.msra.mxu0 %v353
        %387 = vmatprep.subr.mxu0 %v356
        %388 = vmatpush1.msra.mxu0 %v355
        %389 = vmatprep.subr.mxu0 %v358
        %390 = vmatpush1.msra.mxu0 %v357
        %391 = vmatprep.subr.mxu0 %v360
        %392 = vmatpush1.msra.mxu0 %v359
        %393 = vmatprep.subr.mxu0 %v362
        %394 = vmatpush1.msra.mxu0 %v361
        %395 = vmatprep.subr.mxu0 %v364
        %396 = vmatpush1.msra.mxu0 %v363
        %397 = vmatprep.subr.mxu0 %v366
        %398 = vmatpush1.msra.mxu0 %v365
        %399 = vmatprep.subr.mxu0 0.0
        %400 = vmatpush1.msra.mxu0 0.0
        %401 = vmatprep.subr.mxu0 0.0
        %402 = vmatpush1.msra.mxu0 0.0
        %403 = vmatprep.subr.mxu0 0.0
        %404 = vmatpush1.msra.mxu0 0.0
        %405 = vmatprep.subr.mxu0 0.0
        %406 = vmatpush1.msra.mxu0 0.0
        %407 = vmatprep.subr.mxu0 0.0
        %408 = vmatpush1.msra.mxu0 0.0
        %409 = vmatprep.subr.mxu0 0.0
        %410 = vmatpush1.msra.mxu0 0.0
        %411 = vmatprep.subr.mxu0 0.0
        %412 = vmatpush1.msra.mxu0 0.0
        %413 = vmatprep.subr.mxu0 0.0
        %414 = vmatpush1.msra.mxu0 0.0
        %415 = vmatprep.subr.mxu0 0.0
        %416 = vmatpush1.msra.mxu0 0.0
        %417 = vmatprep.subr.mxu0 0.0
        %418 = vmatpush1.msra.mxu0 0.0
        %419 = vmatprep.subr.mxu0 0.0
        %420 = vmatpush1.msra.mxu0 0.0
        %421 = vmatprep.subr.mxu0 0.0
        %422 = vmatpush1.msra.mxu0 0.0
        %423 = vmatprep.subr.mxu0 0.0
        %424 = vmatpush1.msra.mxu0 0.0
        %425 = vmatprep.subr.mxu0 0.0
        %426 = vmatpush1.msra.mxu0 0.0
        %427 = vmatprep.subr.mxu0 0.0
        %428 = vmatpush1.msra.mxu0 0.0
        %429 = vmatprep.subr.mxu0 0.0
        %430 = vmatpush1.msra.mxu0 0.0
        %431 = vmatprep.mubr.f32.mxu0 0.0
        %432 = vmatmul.mubr.f32.gmra.mrb[0].mxu0 %v334
        %v433 = vpop.f32.mrb[0].mxu0
        %v434 = vadd.f32 0.0, %v433
        %v435 = vpop.f32.mrb[0].mxu0
        %v436 = vadd.f32 0.0, %v435
        %437 = vdwg.mxu0
        %v438 = vsub.f32 0.0, %v434
        %v439 = vsub.f32 0.0, %v436
        %v440 = vmul.f32 %v438, 1.442695
        %v441 = vpow.pop %v440
        %v442 = vmul.f32 %v439, 1.442695
        %v443 = vpow.pop %v442
        %v444 = vadd.f32 %v441, 1.0
        %v445 = vadd.f32 %v443, 1.0
        %v446 = vrcp.pop %v444
        %v447 = vrcp.pop %v445
        %v448 = vmul.f32 %v434, %v446
        %v449 = vmul.f32 %v436, %v447
        %v450 = vld [vmem:[#allocation8] sm:$0xff]
        %v451 = vld [vmem:[#allocation8 + $0x8] sm:$0xff]
        %v452 = vld [vmem:[#allocation8 + $0x10] sm:$0xff]
        %v453 = vld [vmem:[#allocation8 + $0x18] sm:$0xff]
        %v454 = vld [vmem:[#allocation8 + $0x20] sm:$0xff]
        %v455 = vld [vmem:[#allocation8 + $0x28] sm:$0xff]
        %v456 = vld [vmem:[#allocation8 + $0x30] sm:$0xff]
        %v457 = vld [vmem:[#allocation8 + $0x38] sm:$0xff]
        %v458 = vld [vmem:[#allocation8 + $0x40] sm:$0xff]
        %v459 = vld [vmem:[#allocation8 + $0x48] sm:$0xff]
        %v460 = vld [vmem:[#allocation8 + $0x50] sm:$0xff]
        %v461 = vld [vmem:[#allocation8 + $0x58] sm:$0xff]
        %v462 = vld [vmem:[#allocation8 + $0x60] sm:$0xff]
        %v463 = vld [vmem:[#allocation8 + $0x68] sm:$0xff]
        %v464 = vld [vmem:[#allocation8 + $0x70] sm:$0xff]
        %v465 = vld [vmem:[#allocation8 + $0x78] sm:$0xff]
        %v466 = vld [vmem:[#allocation8 + $0x80] sm:$0xff]
        %v467 = vld [vmem:[#allocation8 + $0x88] sm:$0xff]
        %v468 = vld [vmem:[#allocation8 + $0x90] sm:$0xff]
        %v469 = vld [vmem:[#allocation8 + $0x98] sm:$0xff]
        %v470 = vld [vmem:[#allocation8 + $0xa0] sm:$0xff]
        %v471 = vld [vmem:[#allocation8 + $0xa8] sm:$0xff]
        %v472 = vld [vmem:[#allocation8 + $0xb0] sm:$0xff]
        %v473 = vld [vmem:[#allocation8 + $0xb8] sm:$0xff]
        %v474 = vld [vmem:[#allocation8 + $0xc0] sm:$0xff]
        %v475 = vld [vmem:[#allocation8 + $0xc8] sm:$0xff]
        %v476 = vld [vmem:[#allocation8 + $0xd0] sm:$0xff]
        %v477 = vld [vmem:[#allocation8 + $0xd8] sm:$0xff]
        %v478 = vld [vmem:[#allocation8 + $0xe0] sm:$0xff]
        %v479 = vld [vmem:[#allocation8 + $0xe8] sm:$0xff]
        %v480 = vld [vmem:[#allocation8 + $0xf0] sm:$0xff]
        %v481 = vld [vmem:[#allocation8 + $0xf8] sm:$0xff]
        %482 = vmatprep.subr.mxu0 0.0
        %483 = vmatpush1.msra.mxu0 %v450
        %484 = vmatprep.subr.mxu0 0.0
        %485 = vmatpush1.msra.mxu0 %v451
        %486 = vmatprep.subr.mxu0 0.0
        %487 = vmatpush1.msra.mxu0 %v452
        %488 = vmatprep.subr.mxu0 0.0
        %489 = vmatpush1.msra.mxu0 %v453
        %490 = vmatprep.subr.mxu0 0.0
        %491 = vmatpush1.msra.mxu0 %v454
        %492 = vmatprep.subr.mxu0 0.0
        %493 = vmatpush1.msra.mxu0 %v455
        %494 = vmatprep.subr.mxu0 0.0
        %495 = vmatpush1.msra.mxu0 %v456
        %496 = vmatprep.subr.mxu0 0.0
        %497 = vmatpush1.msra.mxu0 %v457
        %498 = vmatprep.subr.mxu0 0.0
        %499 = vmatpush1.msra.mxu0 %v458
        %500 = vmatprep.subr.mxu0 0.0
        %501 = vmatpush1.msra.mxu0 %v459
        %502 = vmatprep.subr.mxu0 0.0
        %503 = vmatpush1.msra.mxu0 %v460
        %504 = vmatprep.subr.mxu0 0.0
        %505 = vmatpush1.msra.mxu0 %v461
        %506 = vmatprep.subr.mxu0 0.0
        %507 = vmatpush1.msra.mxu0 %v462
        %508 = vmatprep.subr.mxu0 0.0
        %509 = vmatpush1.msra.mxu0 %v463
        %510 = vmatprep.subr.mxu0 0.0
        %511 = vmatpush1.msra.mxu0 %v464
        %512 = vmatprep.subr.mxu0 0.0
        %513 = vmatpush1.msra.mxu0 %v465
        %514 = vmatprep.subr.mxu0 0.0
        %515 = vmatpush1.msra.mxu0 %v466
        %516 = vmatprep.subr.mxu0 0.0
        %517 = vmatpush1.msra.mxu0 %v467
        %518 = vmatprep.subr.mxu0 0.0
        %519 = vmatpush1.msra.mxu0 %v468
        %520 = vmatprep.subr.mxu0 0.0
        %521 = vmatpush1.msra.mxu0 %v469
        %522 = vmatprep.subr.mxu0 0.0
        %523 = vmatpush1.msra.mxu0 %v470
        %524 = vmatprep.subr.mxu0 0.0
        %525 = vmatpush1.msra.mxu0 %v471
        %526 = vmatprep.subr.mxu0 0.0
        %527 = vmatpush1.msra.mxu0 %v472
        %528 = vmatprep.subr.mxu0 0.0
        %529 = vmatpush1.msra.mxu0 %v473
        %530 = vmatprep.subr.mxu0 0.0
        %531 = vmatpush1.msra.mxu0 %v474
        %532 = vmatprep.subr.mxu0 0.0
        %533 = vmatpush1.msra.mxu0 %v475
        %534 = vmatprep.subr.mxu0 0.0
        %535 = vmatpush1.msra.mxu0 %v476
        %536 = vmatprep.subr.mxu0 0.0
        %537 = vmatpush1.msra.mxu0 %v477
        %538 = vmatprep.subr.mxu0 0.0
        %539 = vmatpush1.msra.mxu0 %v478
        %540 = vmatprep.subr.mxu0 0.0
        %541 = vmatpush1.msra.mxu0 %v479
        %542 = vmatprep.subr.mxu0 0.0
        %543 = vmatpush1.msra.mxu0 %v480
        %544 = vmatprep.subr.mxu0 0.0
        %545 = vmatpush1.msra.mxu0 %v481
        %546 = vmatprep.mubr.f32.mxu0 %v449
        %547 = vmatmul.mubr.f32.gmra.mrb[0].mxu0 %v448
        %v548 = vpop.f32.mrb[0].mxu0
        %v549 = vadd.f32 0.0, %v548
        %v550 = vpop.f32.mrb[0].mxu0
        %551 = vdwg.mxu0
        %v552 = vld [vmem:[%s296] sm:$0xff]
        %v553 = vadd.f32 %v552, %v549
        %554 = vst [vmem:[%s296] sm:$0xff] %v553
        %s555 = sand.u32 %s163, 1
        %s556 = scalar_lea.sflag [#allocation5], %s555
        %s557 = sand.u32 %s163, 1
        %s558 = smul.addr %s557, 8
        %s559 = scalar_lea.vmem [#allocation9], %s558
        // Predicated region
        $region57: #{tpu_custom_call.1} parent=39 // pred_check
          %p560 = pneg %p173
        $region58: #{tpu_custom_call.1} parent=39 // pred_check_branch
          %562 = sbr.rel (%p560) target = $region60
        $region59: #{tpu_custom_call.1} parent=39 // pred_region
          %s564 = ssub.s32 128, 128
          %565 = vsyncadd %s556, %s564
          %s566 = smul.addr %s27, 128
          %s567 = scalar_lea.hbm %s5, %s566
          %s569 = sshll.u32 %s559, 4
          %s570 = int_to_ptr.vmem [resolvable:$true] %s569
          %572 = dma.vmem_to_hbm [thread:$0]  %s570, 128, %s567, %s556
        $region60: #{tpu_custom_call.1} parent=39 // pred_fallthru
          _
      $region40: #{tpu_custom_call.1} parent=5 // pred_fallthru
        _
      %p573 = scmp.le.s32.totalorder 2, %s18
      // Predicated region
      $region61: #{tpu_custom_call.1} parent=5 // pred_check
        %p574 = pneg %p573
      $region62: #{tpu_custom_call.1} parent=5 // pred_check_branch
        %576 = sbr.rel (%p574) target = $region64
      $region63: #{tpu_custom_call.1} parent=5 // pred_region
        %s577 = ssub.s32 %s18, 2
        // Predicated region
        $region65: #{tpu_custom_call.1} parent=63 // pred_check
          %p578 = pneg %p179
        $region66: #{tpu_custom_call.1} parent=63 // pred_check_branch
          %580 = sbr.rel (%p578) target = $region68
        $region67: #{tpu_custom_call.1} parent=63 // pred_region
          %s581 = sand.u32 %s164, 1
          %s582 = scalar_lea.sflag [#allocation5], %s581
          %s583 = sand.u32 %s164, 1
          %s584 = smul.addr %s583, 8
          %s585 = scalar_lea.vmem [#allocation9], %s584
          %586 = dma.done %s582, 128
        $region68: #{tpu_custom_call.1} parent=63 // pred_fallthru
          _
      $region64: #{tpu_custom_call.1} parent=5 // pred_fallthru
        _
    $region6: #{tpu_custom_call.1} parent=1 // loop_footer
      %s22 = sadd.s32 1, %s18
    $region7: #{tpu_custom_call.1} parent=1 // loop_footer_branch
      %17 = sbr.rel target = $region3
    $region8: #{tpu_custom_call.1} parent=1 // loop_exit
      _
    %587 = vsyncpa [#allocation4], 1
    %s588 = scalar_lea.sflag [#allocation4], 1
    %589 = vsyncpa %s588, 1
    %590 = vsyncpa [#allocation7], 1
    %591 = vsyncpa [#allocation5], 1
    %s592 = scalar_lea.sflag [#allocation5], 1
    %593 = vsyncpa %s592, 1

</llo_original>
